<compile_context>
chip_gen: v5e
topology: v5e:2x2
jax: 0.10.0
libtpu: 0.0.40
codegen_flags: <defaults>
</compile_context>

<pallas_src>
import jax
import jax.numpy as jnp
from jax.experimental import pallas as pl
from jax.experimental.pallas import tpu as pltpu


def _gated_sum_kernel_packed(a_ref, b_ref, w_ref, seg_ref, bias_ref, out_ref):
    """Lane-packed path: each row of the tile holds k original rows (k*D = L lanes)."""
    a = a_ref[...].astype(jnp.float32)            # (tm, L)
    b = b_ref[...].astype(jnp.float32)            # (tm, L)
    w = w_ref[...].astype(jnp.float32)            # (2, L): row 0 = wa tiled, row 1 = wb tiled
    wa = w[0:1, :]
    wb = w[1:2, :]
    bias = bias_ref[0]                            # scalar from SMEM

    p = a * wa + b * wb                           # (tm, L) per-lane gate contributions
    # Segmented sum + broadcast back in one MXU matmul: seg[i, j] = 1 iff lanes
    # i and j belong to the same original row (same D-sized segment).
    s = jnp.dot(p, seg_ref[...],
                precision=jax.lax.Precision.HIGHEST,
                preferred_element_type=jnp.float32)               # (tm, L)
    gate = jax.nn.sigmoid(s + bias)                                # (tm, L)

    out_ref[...] = (b + gate * (a - b)).astype(out_ref.dtype)


def _gated_sum_kernel_rowgate(a_ref, b_ref, w_ref, bias_ref, out_ref):
    """Unpacked path (D >= 128 or D does not divide 128): one gate per row."""
    a = a_ref[...].astype(jnp.float32)            # (tm, D)
    b = b_ref[...].astype(jnp.float32)            # (tm, D)
    w = w_ref[...].astype(jnp.float32)            # (2, D)
    wa = w[0:1, :]
    wb = w[1:2, :]
    bias = bias_ref[0]

    s = jnp.sum(a * wa + b * wb, axis=-1, keepdims=True) + bias    # (tm, 1)
    gate = jax.nn.sigmoid(s)

    out_ref[...] = (b + gate * (a - b)).astype(out_ref.dtype)


def gated_sum(input_a, input_b, weight, bias, *, target_tile_bytes=2 << 20):
    """input_a, input_b: (..., D); weight: (1, 2*D) (PyTorch Linear layout); bias: (1,)."""
    if input_a.shape != input_b.shape:
        raise ValueError("The input must have the same size.")
    D = input_a.shape[-1]
    if weight.shape != (1, 2 * D):
        raise ValueError("Gate weight must have shape (1, 2*input_dim).")

    orig_shape = input_a.shape
    dtype = input_a.dtype
    a2 = input_a.reshape(-1, D)
    b2 = input_b.reshape(-1, D)
    N = a2.shape[0]

    wa = weight[:, :D]
    wb = weight[:, D:]

    # Lane-dense packing factor: fold k rows into one 128-lane row when D | 128.
    k = 128 // D if (D < 128 and 128 % D == 0) else 1

    if k > 1:
        rem = (-N) % k
        if rem:
            # TODO(synk): this tiny (< k rows) tail pad still copies a2/b2 in HBM;
            # a split main/tail dispatch would avoid it entirely.
            a2 = jnp.pad(a2, ((0, rem), (0, 0)))
            b2 = jnp.pad(b2, ((0, rem), (0, 0)))
        L = k * D                                          # == 128
        a2 = a2.reshape(-1, L)                             # free row-major reshape
        b2 = b2.reshape(-1, L)
        w2 = jnp.concatenate([jnp.tile(wa, (1, k)), jnp.tile(wb, (1, k))], axis=0)  # (2, L)
        seg_id = jnp.arange(L, dtype=jnp.int32) // D
        seg = (seg_id[:, None] == seg_id[None, :]).astype(jnp.float32)              # (L, L)
    else:
        L = D
        w2 = jnp.concatenate([wa, wb], axis=0)             # (2, D)
        seg = None

    Np = a2.shape[0]
    bias1 = bias.reshape(1).astype(jnp.float32)

    # Row tile sized for ~target_tile_bytes of f32 per streamed array (keeps
    # intermediates + double-buffered pipeline well inside 48 MiB of VMEM on
    # v5e/v6e/v7x), multiple of 8 sublanes, or the full row extent if small.
    row_bytes_f32 = L * 4
    block_rows = int(max(8, (target_tile_bytes // row_bytes_f32) // 8 * 8))
    if block_rows >= Np:
        block_rows = Np            # full array dim: allowed even if not a multiple of 8
    grid = (pl.cdiv(Np, block_rows),)   # ragged last block handled by Pallas (no jnp.pad)

    row_spec = pl.BlockSpec((block_rows, L), lambda i: (i, 0))
    w_spec = pl.BlockSpec((2, L), lambda i: (0, 0))
    bias_spec = pl.BlockSpec(memory_space=pltpu.MemorySpace.SMEM)

    if k > 1:
        kernel = _gated_sum_kernel_packed
        in_specs = [row_spec, row_spec, w_spec,
                    pl.BlockSpec((L, L), lambda i: (0, 0)), bias_spec]
        args = (a2, b2, w2, seg, bias1)
    else:
        kernel = _gated_sum_kernel_rowgate
        in_specs = [row_spec, row_spec, w_spec, bias_spec]
        args = (a2, b2, w2, bias1)

    out = pl.pallas_call(
        kernel,
        out_shape=jax.ShapeDtypeStruct((Np, L), dtype),
        grid_spec=pltpu.PrefetchScalarGridSpec(
            num_scalar_prefetch=0,
            grid=grid,
            in_specs=in_specs,
            out_specs=row_spec,
        ),
        compiler_params=pltpu.CompilerParams(
            dimension_semantics=("parallel",),           # shards rows across v7x's 2 TCs
            vmem_limit_bytes=48 * 1024 * 1024,           # explicit; safe on v5e/v6e/v7x
        ),
    )(*args)

    if k > 1:
        out = out.reshape(-1, D)[:N]
    return out.reshape(orig_shape)


def _reference(input_a, input_b, weight, bias):
    # Elementwise formulation of Linear(concat([a, b], -1)) to keep the
    # reference in full f32 (avoids TPU default-precision dot in the check).
    D = input_a.shape[-1]
    wa = weight[:, :D].reshape(D)
    wb = weight[:, D:].reshape(D)
    logits = (input_a * wa).sum(-1, keepdims=True) \
        + (input_b * wb).sum(-1, keepdims=True) + bias
    gate = jax.nn.sigmoid(logits)
    return gate * input_a + (1.0 - gate) * input_b


if __name__ == "__main__":
    key = jax.random.PRNGKey(0)
    k_a, k_b, k_w, k_bias = jax.random.split(key, 4)

    batch, seq, input_dim = 2, 8, 32
    input_a = jax.random.normal(k_a, (batch, seq, input_dim), dtype=jnp.float32)
    input_b = jax.random.normal(k_b, (batch, seq, input_dim), dtype=jnp.float32)

    # Deterministic Linear(input_dim*2 -> 1) parameters (PyTorch-style uniform init).
    bound = 1.0 / jnp.sqrt(2.0 * input_dim)
    weight = jax.random.uniform(k_w, (1, 2 * input_dim), minval=-bound, maxval=bound,
                                dtype=jnp.float32)
    bias = jax.random.uniform(k_bias, (1,), minval=-bound, maxval=bound,
                              dtype=jnp.float32)

    # Main check: lane-packed path (D = 32 divides 128).
    out = jax.block_until_ready(gated_sum(input_a, input_b, weight, bias))
    ref = _reference(input_a, input_b, weight, bias)
    assert out.shape == input_a.shape
    assert jnp.allclose(out, ref, atol=1e-4, rtol=1e-4)

    # Packed path with a row count not divisible by the packing factor.
    a2 = jax.random.normal(k_b, (3, 5, input_dim), dtype=jnp.float32)
    b2 = jax.random.normal(k_a, (3, 5, input_dim), dtype=jnp.float32)
    out2 = jax.block_until_ready(gated_sum(a2, b2, weight, bias))
    ref2 = _reference(a2, b2, weight, bias)
    assert jnp.allclose(out2, ref2, atol=1e-4, rtol=1e-4)

    # Unpacked (row-gate) path: D that does not divide 128.
    D3 = 160
    k_w3, k_bias3 = jax.random.split(k_w)
    a3 = jax.random.normal(k_a, (2, 7, D3), dtype=jnp.float32)
    b3 = jax.random.normal(k_b, (2, 7, D3), dtype=jnp.float32)
    w3 = jax.random.uniform(k_w3, (1, 2 * D3), minval=-0.05, maxval=0.05,
                            dtype=jnp.float32)
    bias3 = jax.random.uniform(k_bias3, (1,), minval=-0.05, maxval=0.05,
                               dtype=jnp.float32)
    out3 = jax.block_until_ready(gated_sum(a3, b3, w3, bias3))
    ref3 = _reference(a3, b3, w3, bias3)
    assert jnp.allclose(out3, ref3, atol=1e-4, rtol=1e-4)

    print("KERNEL_OK")
</pallas_src>

<mosaic_0001>
module attributes {stable_mosaic.version = 11 : i64} {
  func.func @_gated_sum_kernel_packed(%arg0: i32, %arg1: memref<4x128xf32, #tpu.memory_space<vmem>>, %arg2: memref<4x128xf32, #tpu.memory_space<vmem>>, %arg3: memref<2x128xf32, #tpu.memory_space<vmem>>, %arg4: memref<128x128xf32, #tpu.memory_space<vmem>>, %arg5: memref<1xf32, #tpu.memory_space<smem>>, %arg6: memref<4x128xf32, #tpu.memory_space<vmem>>) attributes {dimension_semantics = [#tpu.dimension_semantics<parallel>], iteration_bounds = array<i64: 1>, scalar_prefetch = 0 : i64, scratch_operands = 0 : i64, tpu.core_type = #tpu.core_type<tc>, window_params = [{transform_indices = @transform_0, window_bounds = array<i64: 4, 128>}, {transform_indices = @transform_1, window_bounds = array<i64: 4, 128>}, {pipeline_mode = #tpu.pipeline_mode<synchronous>, transform_indices = @transform_2, window_bounds = array<i64: 2, 128>}, {pipeline_mode = #tpu.pipeline_mode<synchronous>, transform_indices = @transform_3, window_bounds = array<i64: 128, 128>}, {transform_indices = @transform_4, window_bounds = array<i64: 1>}, {transform_indices = @transform_5, window_bounds = array<i64: 4, 128>}]} {
    %c0 = arith.constant 0 : index
    %c0_0 = arith.constant 0 : index
    %0 = vector.load %arg1[%c0, %c0_0] : memref<4x128xf32, #tpu.memory_space<vmem>>, vector<4x128xf32>
    %c0_1 = arith.constant 0 : index
    %c0_2 = arith.constant 0 : index
    %1 = vector.load %arg2[%c0_1, %c0_2] : memref<4x128xf32, #tpu.memory_space<vmem>>, vector<4x128xf32>
    %c0_3 = arith.constant 0 : index
    %c0_4 = arith.constant 0 : index
    %2 = vector.load %arg3[%c0_3, %c0_4] : memref<2x128xf32, #tpu.memory_space<vmem>>, vector<2x128xf32>
    %3 = vector.extract_strided_slice %2 {offsets = [0, 0], sizes = [1, 128], strides = [1, 1]} : vector<2x128xf32> to vector<1x128xf32>
    %4 = vector.extract_strided_slice %2 {offsets = [1, 0], sizes = [1, 128], strides = [1, 1]} : vector<2x128xf32> to vector<1x128xf32>
    %c0_5 = arith.constant 0 : index
    %5 = memref.load %arg5[%c0_5] : memref<1xf32, #tpu.memory_space<smem>>
    %6 = vector.broadcast %3 : vector<1x128xf32> to vector<4x128xf32>
    %7 = arith.mulf %0, %6 : vector<4x128xf32>
    %8 = vector.broadcast %4 : vector<1x128xf32> to vector<4x128xf32>
    %9 = arith.mulf %1, %8 : vector<4x128xf32>
    %10 = arith.addf %7, %9 : vector<4x128xf32>
    %c0_6 = arith.constant 0 : index
    %c0_7 = arith.constant 0 : index
    %11 = vector.load %arg4[%c0_6, %c0_7] : memref<128x128xf32, #tpu.memory_space<vmem>>, vector<128x128xf32>
    %cst = arith.constant dense<0.000000e+00> : vector<4x128xf32>
    %12 = tpu.matmul %10, %11, %cst {dimension_numbers = #tpu.dot_dimension_numbers<[1], [0], [0], [1], [0, 0, 1, 1], [], []>, precision = #tpu.contract_precision<fp32>} : vector<4x128xf32>, vector<128x128xf32>, vector<4x128xf32> -> vector<4x128xf32>
    %13 = vector.broadcast %5 : f32 to vector<4x128xf32>
    %14 = arith.addf %12, %13 : vector<4x128xf32>
    %15 = arith.negf %14 : vector<4x128xf32>
    %16 = math.exp %15 : vector<4x128xf32>
    %cst_8 = arith.constant 1.000000e+00 : f32
    %17 = vector.broadcast %cst_8 : f32 to vector<4x128xf32>
    %18 = arith.addf %17, %16 : vector<4x128xf32>
    %19 = arith.divf %17, %18 : vector<4x128xf32>
    %20 = arith.subf %0, %1 : vector<4x128xf32>
    %21 = arith.mulf %19, %20 : vector<4x128xf32>
    %22 = arith.addf %1, %21 : vector<4x128xf32>
    %c0_9 = arith.constant 0 : index
    %c0_10 = arith.constant 0 : index
    %23 = vector.load %arg6[%c0_9, %c0_10] : memref<4x128xf32, #tpu.memory_space<vmem>>, vector<4x128xf32>
    tpu.vector_store %arg6[%c0_9, %c0_10], %22 {strides = array<i32>} : memref<4x128xf32, #tpu.memory_space<vmem>>, vector<4x128xf32>,
    return
  }
  func.func @transform_0(%arg0: i32) -> (i32, i32) {
    %c0_i32 = arith.constant 0 : i32
    %c0_i32_0 = arith.constant 0 : i32
    return %arg0, %c0_i32 : i32, i32
  }
  func.func @transform_1(%arg0: i32) -> (i32, i32) {
    %c0_i32 = arith.constant 0 : i32
    %c0_i32_0 = arith.constant 0 : i32
    return %arg0, %c0_i32 : i32, i32
  }
  func.func @transform_2(%arg0: i32) -> (i32, i32) {
    %c0_i32 = arith.constant 0 : i32
    %c0_i32_0 = arith.constant 0 : i32
    %c0_i32_1 = arith.constant 0 : i32
    return %c0_i32, %c0_i32_0 : i32, i32
  }
  func.func @transform_3(%arg0: i32) -> (i32, i32) {
    %c0_i32 = arith.constant 0 : i32
    %c0_i32_0 = arith.constant 0 : i32
    %c0_i32_1 = arith.constant 0 : i32
    return %c0_i32, %c0_i32_0 : i32, i32
  }
  func.func @transform_4(%arg0: i32) -> i32 {
    %c0_i32 = arith.constant 0 : i32
    %c0_i32_0 = arith.constant 0 : i32
    return %c0_i32 : i32
  }
  func.func @transform_5(%arg0: i32) -> (i32, i32) {
    %c0_i32 = arith.constant 0 : i32
    %c0_i32_0 = arith.constant 0 : i32
    return %arg0, %c0_i32 : i32, i32
  }
}

</mosaic_0001>

<llo_original>
// kernel: tpu_custom_call.1
$region0: #{tpu_custom_call.1}
  #allocation0 [shape = 'u32[]', space=smem, size = 0x4, offset = 0x4, fixed_abs, tag = 'smem constant byte address 0x4 - core index']
  #allocation1 [shape = 'u32[72,128]{1,0:T(1,128)}', space=vmem, size = 0x9000, scoped, tag = 'internal scratch']
  #allocation2 [shape = 'f32[1]{0:T(128)S(6)}', space=smem, size = 0x200, scoped, tag = 'scoped memory for tpu_custom_call.1']
  %s0 = inlined_call_operand.hbm [shape: f32[4,128], index: 0, kind: input, shape index: {}]
  %s1 = inlined_call_operand.hbm [shape: f32[4,128], index: 1, kind: input, shape index: {}]
  %s2 = inlined_call_operand.vmem [shape: f32[2,128], index: 2, kind: input, shape index: {}]
  %s3 = inlined_call_operand.hbm [shape: f32[128,128], index: 3, kind: input, shape index: {}]
  %s4 = inlined_call_operand.<no memory space> [shape: f32[1], index: 4, kind: input, shape index: {}]
  %s5 = inlined_call_operand.hbm [shape: f32[4,128], index: 5, kind: output, shape index: {}]
  %s6 = sld [smem:[#allocation0]]
  $region42: #{tpu_custom_call.1} parent=0
    _
  %s8 = ssub.s32 1, %s6
  %s9 = scalar_select 0, %s8, %s6
  %10 = sst [smem:[#allocation2]] %s4
  $region1: #{tpu_custom_call.1} parent=0
    #allocation3 [shape = 'u8[2048]{0}', space=vmem, size = 0x800, scoped, tag = 'input window, operand 0, single buffered']
    #allocation4 [shape = 's32[1]{0}', space=sflag, size = 0x4, scoped, tag = 'scoped memory for tpu_custom_call.1']
    #allocation5 [shape = 's32[1]{0}', space=sflag, size = 0x4, scoped, tag = 'scoped memory for tpu_custom_call.1']
    #allocation6 [shape = 'u8[2048]{0}', space=vmem, size = 0x800, scoped, tag = 'input window, operand 1, single buffered']
    #allocation7 [shape = 's32[1]{0}', space=sflag, size = 0x4, scoped, tag = 'scoped memory for tpu_custom_call.1']
    #allocation8 [shape = 'u8[65536]{0}', space=vmem, size = 0x10000, scoped, tag = 'input window, operand 3, single buffered']
    #allocation9 [shape = 'u8[2048]{0}', space=vmem, size = 0x800, scoped, tag = 'output window, operand 0, single buffered']
    %11 = vsyncpa [#allocation4], 0
    %12 = vsyncpa [#allocation7], 0
    %13 = vsyncpa [#allocation5], 0
    // Predicated region
    $region2: #{tpu_custom_call.1} parent=1 // pred_check
      _
    $region3: #{tpu_custom_call.1} parent=1 // pred_check_branch
      %15 = sbr.rel (0) target = $region5
    $region4: #{tpu_custom_call.1} parent=1 // pred_region
      %17 = vsyncadd [#allocation4], 0
      %s19 = sshll.u32 %s0, 4
      %s20 = int_to_ptr.hbm [resolvable:$true] %s19
      %s21 = sshll.u32 [#allocation3], 4
      %s22 = int_to_ptr.vmem [resolvable:$true] %s21
      %24 = dma.hbm_to_vmem [thread:$0]  %s20, 64, %s22, [#allocation4]
    $region5: #{tpu_custom_call.1} parent=1 // pred_fallthru
      _
    // Predicated region
    $region6: #{tpu_custom_call.1} parent=1 // pred_check
      _
    $region7: #{tpu_custom_call.1} parent=1 // pred_check_branch
      %26 = sbr.rel (0) target = $region9
    $region8: #{tpu_custom_call.1} parent=1 // pred_region
      %28 = vsyncadd [#allocation7], 0
      %s30 = sshll.u32 %s1, 4
      %s31 = int_to_ptr.hbm [resolvable:$true] %s30
      %s32 = sshll.u32 [#allocation6], 4
      %s33 = int_to_ptr.vmem [resolvable:$true] %s32
      %35 = dma.hbm_to_vmem [thread:$0]  %s31, 64, %s33, [#allocation7]
    $region9: #{tpu_custom_call.1} parent=1 // pred_fallthru
      _
    // Predicated region
    $region10: #{tpu_custom_call.1} parent=1 // pred_check
      _
    $region11: #{tpu_custom_call.1} parent=1 // pred_check_branch
      %37 = sbr.rel (0) target = $region13
    $region12: #{tpu_custom_call.1} parent=1 // pred_region
      _
    $region13: #{tpu_custom_call.1} parent=1 // pred_fallthru
      _
    // Predicated region
    $region14: #{tpu_custom_call.1} parent=1 // pred_check
      _
    $region15: #{tpu_custom_call.1} parent=1 // pred_check_branch
      %39 = sbr.rel (0) target = $region17
    $region16: #{tpu_custom_call.1} parent=1 // pred_region
      %41 = vsyncadd [#allocation7], 0
      %s42 = sshll.u32 %s3, 4
      %s43 = int_to_ptr.hbm [resolvable:$true] %s42
      %s44 = sshll.u32 [#allocation8], 4
      %s45 = int_to_ptr.vmem [resolvable:$true] %s44
      %50 = dma.hbm_to_vmem [thread:$0]  %s43, 2048, %s45, [#allocation7], 128, 128, 8
    $region17: #{tpu_custom_call.1} parent=1 // pred_fallthru
      _
    // Predicated region
    $region18: #{tpu_custom_call.1} parent=1 // pred_check
      _
    $region19: #{tpu_custom_call.1} parent=1 // pred_check_branch
      %52 = sbr.rel (0) target = $region21
    $region20: #{tpu_custom_call.1} parent=1 // pred_region
      _
    $region21: #{tpu_custom_call.1} parent=1 // pred_fallthru
      _
    // Predicated region
    $region22: #{tpu_custom_call.1} parent=1 // pred_check
      _
    $region23: #{tpu_custom_call.1} parent=1 // pred_check_branch
      %54 = sbr.rel (0) target = $region25
    $region24: #{tpu_custom_call.1} parent=1 // pred_region
      %56 = dma.done [#allocation4], 64
    $region25: #{tpu_custom_call.1} parent=1 // pred_fallthru
      _
    // Predicated region
    $region26: #{tpu_custom_call.1} parent=1 // pred_check
      _
    $region27: #{tpu_custom_call.1} parent=1 // pred_check_branch
      %58 = sbr.rel (0) target = $region29
    $region28: #{tpu_custom_call.1} parent=1 // pred_region
      %60 = dma.done [#allocation7], 64
    $region29: #{tpu_custom_call.1} parent=1 // pred_fallthru
      _
    // Predicated region
    $region30: #{tpu_custom_call.1} parent=1 // pred_check
      _
    $region31: #{tpu_custom_call.1} parent=1 // pred_check_branch
      %62 = sbr.rel (0) target = $region33
    $region32: #{tpu_custom_call.1} parent=1 // pred_region
      %64 = dma.done [#allocation7], 2048
    $region33: #{tpu_custom_call.1} parent=1 // pred_fallthru
      _
    %v65 = vld [vmem:[#allocation3] sm:$0xf]
    %v66 = vld [vmem:[#allocation6] sm:$0xf]
    %v67 = vld [vmem:[%s2] sm:$0x3]
    %s68 = sld [smem:[#allocation2]]
    %v69 = vperm.slane %v67, 0
    %v70 = vmul.f32 %v65, %v69
    %v71 = vperm.slane %v67, 1
    %v72 = vmul.f32 %v66, %v71
    %v73 = vadd.f32 %v70, %v72
    %v74 = vld [vmem:[#allocation8] sm:$0xff]
    %v75 = vld [vmem:[#allocation8 + $0x8] sm:$0xff]
    %v76 = vld [vmem:[#allocation8 + $0x10] sm:$0xff]
    %v77 = vld [vmem:[#allocation8 + $0x18] sm:$0xff]
    %v78 = vld [vmem:[#allocation8 + $0x20] sm:$0xff]
    %v79 = vld [vmem:[#allocation8 + $0x28] sm:$0xff]
    %v80 = vld [vmem:[#allocation8 + $0x30] sm:$0xff]
    %v81 = vld [vmem:[#allocation8 + $0x38] sm:$0xff]
    %v82 = vld [vmem:[#allocation8 + $0x40] sm:$0xff]
    %v83 = vld [vmem:[#allocation8 + $0x48] sm:$0xff]
    %v84 = vld [vmem:[#allocation8 + $0x50] sm:$0xff]
    %v85 = vld [vmem:[#allocation8 + $0x58] sm:$0xff]
    %v86 = vld [vmem:[#allocation8 + $0x60] sm:$0xff]
    %v87 = vld [vmem:[#allocation8 + $0x68] sm:$0xff]
    %v88 = vld [vmem:[#allocation8 + $0x70] sm:$0xff]
    %v89 = vld [vmem:[#allocation8 + $0x78] sm:$0xff]
    %v90 = vstv %s68
    %v91 = vand.u32 %v89, 4294901760
    %92 = vmatpush.msra.mxu0 %v91
    %v93 = vand.u32 %v88, 4294901760
    %94 = vmatpush.msra.mxu0 %v93
    %v95 = vand.u32 %v87, 4294901760
    %96 = vmatpush.msra.mxu0 %v95
    %v97 = vand.u32 %v86, 4294901760
    %98 = vmatpush.msra.mxu0 %v97
    %v99 = vand.u32 %v85, 4294901760
    %100 = vmatpush.msra.mxu0 %v99
    %v101 = vand.u32 %v84, 4294901760
    %102 = vmatpush.msra.mxu0 %v101
    %v103 = vand.u32 %v83, 4294901760
    %104 = vmatpush.msra.mxu0 %v103
    %v105 = vand.u32 %v82, 4294901760
    %106 = vmatpush.msra.mxu0 %v105
    %v107 = vand.u32 %v81, 4294901760
    %108 = vmatpush.msra.mxu0 %v107
    %v109 = vand.u32 %v80, 4294901760
    %110 = vmatpush.msra.mxu0 %v109
    %v111 = vand.u32 %v79, 4294901760
    %112 = vmatpush.msra.mxu0 %v111
    %v113 = vand.u32 %v78, 4294901760
    %114 = vmatpush.msra.mxu0 %v113
    %v115 = vand.u32 %v77, 4294901760
    %116 = vmatpush.msra.mxu0 %v115
    %v117 = vand.u32 %v76, 4294901760
    %118 = vmatpush.msra.mxu0 %v117
    %v119 = vand.u32 %v75, 4294901760
    %120 = vmatpush.msra.mxu0 %v119
    %v121 = vand.u32 %v74, 4294901760
    %122 = vmatpush.msra.mxu0 %v121
    %v123 = vand.u32 %v73, 4294901760
    %v124 = vsub.f32 %v73, %v123
    %v125 = vand.u32 %v124, 4294901760
    %v126 = vsub.f32 %v124, %v125
    %v127 = vand.u32 %v126, 4294901760
    %128 = vmatmul.f32.gmra.mxu0 %v127
    %v129 = vpop.f32.mrf.mxu0
    %v130 = vadd.f32 %v90, %v129
    %131 = vdwg.mxu0
    %v132 = vand.u32 %v89, 4294901760
    %v133 = vsub.f32 %v89, %v132
    %v134 = vand.u32 %v133, 4294901760
    %v135 = vsub.f32 %v133, %v134
    %v136 = vand.u32 %v135, 4294901760
    %137 = vmatpush.msra.mxu0 %v136
    %v138 = vand.u32 %v88, 4294901760
    %v139 = vsub.f32 %v88, %v138
    %v140 = vand.u32 %v139, 4294901760
    %v141 = vsub.f32 %v139, %v140
    %v142 = vand.u32 %v141, 4294901760
    %143 = vmatpush.msra.mxu0 %v142
    %v144 = vand.u32 %v87, 4294901760
    %v145 = vsub.f32 %v87, %v144
    %v146 = vand.u32 %v145, 4294901760
    %v147 = vsub.f32 %v145, %v146
    %v148 = vand.u32 %v147, 4294901760
    %149 = vmatpush.msra.mxu0 %v148
    %v150 = vand.u32 %v86, 4294901760
    %v151 = vsub.f32 %v86, %v150
    %v152 = vand.u32 %v151, 4294901760
    %v153 = vsub.f32 %v151, %v152
    %v154 = vand.u32 %v153, 4294901760
    %155 = vmatpush.msra.mxu0 %v154
    %v156 = vand.u32 %v85, 4294901760
    %v157 = vsub.f32 %v85, %v156
    %v158 = vand.u32 %v157, 4294901760
    %v159 = vsub.f32 %v157, %v158
    %v160 = vand.u32 %v159, 4294901760
    %161 = vmatpush.msra.mxu0 %v160
    %v162 = vand.u32 %v84, 4294901760
    %v163 = vsub.f32 %v84, %v162
    %v164 = vand.u32 %v163, 4294901760
    %v165 = vsub.f32 %v163, %v164
    %v166 = vand.u32 %v165, 4294901760
    %167 = vmatpush.msra.mxu0 %v166
    %v168 = vand.u32 %v83, 4294901760
    %v169 = vsub.f32 %v83, %v168
    %v170 = vand.u32 %v169, 4294901760
    %v171 = vsub.f32 %v169, %v170
    %v172 = vand.u32 %v171, 4294901760
    %173 = vmatpush.msra.mxu0 %v172
    %v174 = vand.u32 %v82, 4294901760
    %v175 = vsub.f32 %v82, %v174
    %v176 = vand.u32 %v175, 4294901760
    %v177 = vsub.f32 %v175, %v176
    %v178 = vand.u32 %v177, 4294901760
    %179 = vmatpush.msra.mxu0 %v178
    %v180 = vand.u32 %v81, 4294901760
    %v181 = vsub.f32 %v81, %v180
    %v182 = vand.u32 %v181, 4294901760
    %v183 = vsub.f32 %v181, %v182
    %v184 = vand.u32 %v183, 4294901760
    %185 = vmatpush.msra.mxu0 %v184
    %v186 = vand.u32 %v80, 4294901760
    %v187 = vsub.f32 %v80, %v186
    %v188 = vand.u32 %v187, 4294901760
    %v189 = vsub.f32 %v187, %v188
    %v190 = vand.u32 %v189, 4294901760
    %191 = vmatpush.msra.mxu0 %v190
    %v192 = vand.u32 %v79, 4294901760
    %v193 = vsub.f32 %v79, %v192
    %v194 = vand.u32 %v193, 4294901760
    %v195 = vsub.f32 %v193, %v194
    %v196 = vand.u32 %v195, 4294901760
    %197 = vmatpush.msra.mxu0 %v196
    %v198 = vand.u32 %v78, 4294901760
    %v199 = vsub.f32 %v78, %v198
    %v200 = vand.u32 %v199, 4294901760
    %v201 = vsub.f32 %v199, %v200
    %v202 = vand.u32 %v201, 4294901760
    %203 = vmatpush.msra.mxu0 %v202
    %v204 = vand.u32 %v77, 4294901760
    %v205 = vsub.f32 %v77, %v204
    %v206 = vand.u32 %v205, 4294901760
    %v207 = vsub.f32 %v205, %v206
    %v208 = vand.u32 %v207, 4294901760
    %209 = vmatpush.msra.mxu0 %v208
    %v210 = vand.u32 %v76, 4294901760
    %v211 = vsub.f32 %v76, %v210
    %v212 = vand.u32 %v211, 4294901760
    %v213 = vsub.f32 %v211, %v212
    %v214 = vand.u32 %v213, 4294901760
    %215 = vmatpush.msra.mxu0 %v214
    %v216 = vand.u32 %v75, 4294901760
    %v217 = vsub.f32 %v75, %v216
    %v218 = vand.u32 %v217, 4294901760
    %v219 = vsub.f32 %v217, %v218
    %v220 = vand.u32 %v219, 4294901760
    %221 = vmatpush.msra.mxu0 %v220
    %v222 = vand.u32 %v74, 4294901760
    %v223 = vsub.f32 %v74, %v222
    %v224 = vand.u32 %v223, 4294901760
    %v225 = vsub.f32 %v223, %v224
    %v226 = vand.u32 %v225, 4294901760
    %227 = vmatpush.msra.mxu0 %v226
    %v228 = vand.u32 %v73, 4294901760
    %229 = vmatmul.f32.gmra.mxu0 %v228
    %v230 = vpop.f32.mrf.mxu0
    %v231 = vadd.f32 %v130, %v230
    %232 = vdwg.mxu0
    %v233 = vand.u32 %v89, 4294901760
    %v234 = vsub.f32 %v89, %v233
    %235 = vmatpush.msra.mxu0 %v234
    %v236 = vand.u32 %v88, 4294901760
    %v237 = vsub.f32 %v88, %v236
    %238 = vmatpush.msra.mxu0 %v237
    %v239 = vand.u32 %v87, 4294901760
    %v240 = vsub.f32 %v87, %v239
    %241 = vmatpush.msra.mxu0 %v240
    %v242 = vand.u32 %v86, 4294901760
    %v243 = vsub.f32 %v86, %v242
    %244 = vmatpush.msra.mxu0 %v243
    %v245 = vand.u32 %v85, 4294901760
    %v246 = vsub.f32 %v85, %v245
    %247 = vmatpush.msra.mxu0 %v246
    %v248 = vand.u32 %v84, 4294901760
    %v249 = vsub.f32 %v84, %v248
    %250 = vmatpush.msra.mxu0 %v249
    %v251 = vand.u32 %v83, 4294901760
    %v252 = vsub.f32 %v83, %v251
    %253 = vmatpush.msra.mxu0 %v252
    %v254 = vand.u32 %v82, 4294901760
    %v255 = vsub.f32 %v82, %v254
    %256 = vmatpush.msra.mxu0 %v255
    %v257 = vand.u32 %v81, 4294901760
    %v258 = vsub.f32 %v81, %v257
    %259 = vmatpush.msra.mxu0 %v258
    %v260 = vand.u32 %v80, 4294901760
    %v261 = vsub.f32 %v80, %v260
    %262 = vmatpush.msra.mxu0 %v261
    %v263 = vand.u32 %v79, 4294901760
    %v264 = vsub.f32 %v79, %v263
    %265 = vmatpush.msra.mxu0 %v264
    %v266 = vand.u32 %v78, 4294901760
    %v267 = vsub.f32 %v78, %v266
    %268 = vmatpush.msra.mxu0 %v267
    %v269 = vand.u32 %v77, 4294901760
    %v270 = vsub.f32 %v77, %v269
    %271 = vmatpush.msra.mxu0 %v270
    %v272 = vand.u32 %v76, 4294901760
    %v273 = vsub.f32 %v76, %v272
    %274 = vmatpush.msra.mxu0 %v273
    %v275 = vand.u32 %v75, 4294901760
    %v276 = vsub.f32 %v75, %v275
    %277 = vmatpush.msra.mxu0 %v276
    %v278 = vand.u32 %v74, 4294901760
    %v279 = vsub.f32 %v74, %v278
    %280 = vmatpush.msra.mxu0 %v279
    %v281 = vand.u32 %v73, 4294901760
    %v282 = vsub.f32 %v73, %v281
    %283 = vmatmul.f32.gmra.mxu0 %v282
    %v284 = vpop.f32.mrf.mxu0
    %v285 = vadd.f32 %v231, %v284
    %286 = vdwg.mxu0
    %v287 = vand.u32 %v89, 4294901760
    %288 = vmatpush.msra.mxu0 %v287
    %v289 = vand.u32 %v88, 4294901760
    %290 = vmatpush.msra.mxu0 %v289
    %v291 = vand.u32 %v87, 4294901760
    %292 = vmatpush.msra.mxu0 %v291
    %v293 = vand.u32 %v86, 4294901760
    %294 = vmatpush.msra.mxu0 %v293
    %v295 = vand.u32 %v85, 4294901760
    %296 = vmatpush.msra.mxu0 %v295
    %v297 = vand.u32 %v84, 4294901760
    %298 = vmatpush.msra.mxu0 %v297
    %v299 = vand.u32 %v83, 4294901760
    %300 = vmatpush.msra.mxu0 %v299
    %v301 = vand.u32 %v82, 4294901760
    %302 = vmatpush.msra.mxu0 %v301
    %v303 = vand.u32 %v81, 4294901760
    %304 = vmatpush.msra.mxu0 %v303
    %v305 = vand.u32 %v80, 4294901760
    %306 = vmatpush.msra.mxu0 %v305
    %v307 = vand.u32 %v79, 4294901760
    %308 = vmatpush.msra.mxu0 %v307
    %v309 = vand.u32 %v78, 4294901760
    %310 = vmatpush.msra.mxu0 %v309
    %v311 = vand.u32 %v77, 4294901760
    %312 = vmatpush.msra.mxu0 %v311
    %v313 = vand.u32 %v76, 4294901760
    %314 = vmatpush.msra.mxu0 %v313
    %v315 = vand.u32 %v75, 4294901760
    %316 = vmatpush.msra.mxu0 %v315
    %v317 = vand.u32 %v74, 4294901760
    %318 = vmatpush.msra.mxu0 %v317
    %v319 = vand.u32 %v73, 4294901760
    %v320 = vsub.f32 %v73, %v319
    %v321 = vand.u32 %v320, 4294901760
    %322 = vmatmul.f32.gmra.mxu0 %v321
    %v323 = vpop.f32.mrf.mxu0
    %v324 = vadd.f32 %v285, %v323
    %325 = vdwg.mxu0
    %v326 = vand.u32 %v89, 4294901760
    %v327 = vsub.f32 %v89, %v326
    %v328 = vand.u32 %v327, 4294901760
    %329 = vmatpush.msra.mxu0 %v328
    %v330 = vand.u32 %v88, 4294901760
    %v331 = vsub.f32 %v88, %v330
    %v332 = vand.u32 %v331, 4294901760
    %333 = vmatpush.msra.mxu0 %v332
    %v334 = vand.u32 %v87, 4294901760
    %v335 = vsub.f32 %v87, %v334
    %v336 = vand.u32 %v335, 4294901760
    %337 = vmatpush.msra.mxu0 %v336
    %v338 = vand.u32 %v86, 4294901760
    %v339 = vsub.f32 %v86, %v338
    %v340 = vand.u32 %v339, 4294901760
    %341 = vmatpush.msra.mxu0 %v340
    %v342 = vand.u32 %v85, 4294901760
    %v343 = vsub.f32 %v85, %v342
    %v344 = vand.u32 %v343, 4294901760
    %345 = vmatpush.msra.mxu0 %v344
    %v346 = vand.u32 %v84, 4294901760
    %v347 = vsub.f32 %v84, %v346
    %v348 = vand.u32 %v347, 4294901760
    %349 = vmatpush.msra.mxu0 %v348
    %v350 = vand.u32 %v83, 4294901760
    %v351 = vsub.f32 %v83, %v350
    %v352 = vand.u32 %v351, 4294901760
    %353 = vmatpush.msra.mxu0 %v352
    %v354 = vand.u32 %v82, 4294901760
    %v355 = vsub.f32 %v82, %v354
    %v356 = vand.u32 %v355, 4294901760
    %357 = vmatpush.msra.mxu0 %v356
    %v358 = vand.u32 %v81, 4294901760
    %v359 = vsub.f32 %v81, %v358
    %v360 = vand.u32 %v359, 4294901760
    %361 = vmatpush.msra.mxu0 %v360
    %v362 = vand.u32 %v80, 4294901760
    %v363 = vsub.f32 %v80, %v362
    %v364 = vand.u32 %v363, 4294901760
    %365 = vmatpush.msra.mxu0 %v364
    %v366 = vand.u32 %v79, 4294901760
    %v367 = vsub.f32 %v79, %v366
    %v368 = vand.u32 %v367, 4294901760
    %369 = vmatpush.msra.mxu0 %v368
    %v370 = vand.u32 %v78, 4294901760
    %v371 = vsub.f32 %v78, %v370
    %v372 = vand.u32 %v371, 4294901760
    %373 = vmatpush.msra.mxu0 %v372
    %v374 = vand.u32 %v77, 4294901760
    %v375 = vsub.f32 %v77, %v374
    %v376 = vand.u32 %v375, 4294901760
    %377 = vmatpush.msra.mxu0 %v376
    %v378 = vand.u32 %v76, 4294901760
    %v379 = vsub.f32 %v76, %v378
    %v380 = vand.u32 %v379, 4294901760
    %381 = vmatpush.msra.mxu0 %v380
    %v382 = vand.u32 %v75, 4294901760
    %v383 = vsub.f32 %v75, %v382
    %v384 = vand.u32 %v383, 4294901760
    %385 = vmatpush.msra.mxu0 %v384
    %v386 = vand.u32 %v74, 4294901760
    %v387 = vsub.f32 %v74, %v386
    %v388 = vand.u32 %v387, 4294901760
    %389 = vmatpush.msra.mxu0 %v388
    %v390 = vand.u32 %v73, 4294901760
    %391 = vmatmul.f32.gmra.mxu0 %v390
    %v392 = vpop.f32.mrf.mxu0
    %v393 = vadd.f32 %v324, %v392
    %394 = vdwg.mxu0
    %v395 = vand.u32 %v89, 4294901760
    %396 = vmatpush.msra.mxu0 %v395
    %v397 = vand.u32 %v88, 4294901760
    %398 = vmatpush.msra.mxu0 %v397
    %v399 = vand.u32 %v87, 4294901760
    %400 = vmatpush.msra.mxu0 %v399
    %v401 = vand.u32 %v86, 4294901760
    %402 = vmatpush.msra.mxu0 %v401
    %v403 = vand.u32 %v85, 4294901760
    %404 = vmatpush.msra.mxu0 %v403
    %v405 = vand.u32 %v84, 4294901760
    %406 = vmatpush.msra.mxu0 %v405
    %v407 = vand.u32 %v83, 4294901760
    %408 = vmatpush.msra.mxu0 %v407
    %v409 = vand.u32 %v82, 4294901760
    %410 = vmatpush.msra.mxu0 %v409
    %v411 = vand.u32 %v81, 4294901760
    %412 = vmatpush.msra.mxu0 %v411
    %v413 = vand.u32 %v80, 4294901760
    %414 = vmatpush.msra.mxu0 %v413
    %v415 = vand.u32 %v79, 4294901760
    %416 = vmatpush.msra.mxu0 %v415
    %v417 = vand.u32 %v78, 4294901760
    %418 = vmatpush.msra.mxu0 %v417
    %v419 = vand.u32 %v77, 4294901760
    %420 = vmatpush.msra.mxu0 %v419
    %v421 = vand.u32 %v76, 4294901760
    %422 = vmatpush.msra.mxu0 %v421
    %v423 = vand.u32 %v75, 4294901760
    %424 = vmatpush.msra.mxu0 %v423
    %v425 = vand.u32 %v74, 4294901760
    %426 = vmatpush.msra.mxu0 %v425
    %v427 = vand.u32 %v73, 4294901760
    %428 = vmatmul.f32.gmra.mxu0 %v427
    %v429 = vpop.f32.mrf.mxu0
    %v430 = vadd.f32 %v393, %v429
    %431 = vdwg.mxu0
    %v432 = vxor.u32 %v430, 2147483648
    %v433 = vmul.f32 %v432, 1.442695
    %v434 = vpow.pop %v433
    %v435 = vadd.f32 %v434, 1.0
    %v436 = vrcp.pop %v435
    %v437 = vmul.f32 %v435, %v436
    %v438 = vsub.f32 1.0, %v437
    %v439 = vmul.f32 %v436, %v438
    %v440 = vadd.f32 %v436, %v439
    %vm441 = vweird.f32 %v435
    %vm442 = vweird.f32 %v436
    %vm443 = vmor %vm441, %vm442
    %v444 = vsel %vm443, %v436, %v440
    %v445 = vand.u32 2147483647, %v435
    %vm446 = vcmp.eq.f32.partialorder %v445, 8.507059e+37
    %v447 = vand.u32 %v435, 2147483648
    %v448 = vor.u32 1.1754944e-38, %v447
    %v449 = vsel %vm446, %v448, %v444
    %v450 = vmul.f32 1.0, %v449
    %v451 = vsub.f32 %v65, %v66
    %v452 = vmul.f32 %v450, %v451
    %v453 = vadd.f32 %v66, %v452
    %454 = vst [vmem:[#allocation9] sm:$0xf] %v453
    // Predicated region
    $region34: #{tpu_custom_call.1} parent=1 // pred_check
      _
    $region35: #{tpu_custom_call.1} parent=1 // pred_check_branch
      %456 = sbr.rel (0) target = $region37
    $region36: #{tpu_custom_call.1} parent=1 // pred_region
      %458 = vsyncadd [#allocation5], 0
      %s460 = sshll.u32 [#allocation9], 4
      %s461 = int_to_ptr.vmem [resolvable:$true] %s460
      %s462 = sshll.u32 %s5, 4
      %s463 = int_to_ptr.hbm [resolvable:$true] %s462
      %465 = dma.vmem_to_hbm [thread:$0]  %s461, 64, %s463, [#allocation5]
    $region37: #{tpu_custom_call.1} parent=1 // pred_fallthru
      _
    // Predicated region
    $region38: #{tpu_custom_call.1} parent=1 // pred_check
      _
    $region39: #{tpu_custom_call.1} parent=1 // pred_check_branch
      %467 = sbr.rel (0) target = $region41
    $region40: #{tpu_custom_call.1} parent=1 // pred_region
      %469 = dma.done [#allocation5], 64
    $region41: #{tpu_custom_call.1} parent=1 // pred_fallthru
      _
    %470 = vsyncpa [#allocation4], 1
    %471 = vsyncpa [#allocation7], 1
    %472 = vsyncpa [#allocation5], 1

</llo_original>
